<compile_context>
chip_gen: v6e
topology: v6e:2x2x1
jax: 0.10.0
libtpu: 0.0.40
codegen_flags: <defaults>
</compile_context>

<pallas_src>
import jax
import jax.numpy as jnp
from jax.experimental import pallas as pl
from jax.experimental.pallas import tpu as pltpu


def _vmem_capacity_bytes():
    # Clamp to the v7x per-TensorCore VMEM (64 MiB): some stacks report the
    # per-chip capacity, which would oversize blocks on v7x.
    try:
        cap = int(pltpu.get_tpu_info().vmem_capacity_bytes)
    except Exception:
        cap = 64 * 1024 * 1024
    return min(cap, 64 * 1024 * 1024)


def _choose_tb(batch, cap):
    """Largest divisor of `batch` <= cap.  Prefer one that keeps a 2D (tb, H)
    output block legal (tb % 8 == 0 or tb == batch) -> sublane-dense stores."""
    cap = max(1, min(cap, batch))
    for cand in range(cap, 0, -1):
        if batch % cand == 0 and (cand % 8 == 0 or cand == batch):
            return cand, True
    for cand in range(cap, 0, -1):
        if batch % cand == 0:
            return cand, False
    return 1, False


def _attention_kernel(x_ref, w_ref, b_ref, o_ref):
    # x_ref: (TB, S, H) VMEM (input dtype)   w_ref: (1, H) VMEM (input dtype)
    # b_ref: (1, 1) SMEM (f32)               o_ref: (TB, H) or (TB, 1, H) VMEM
    x = x_ref[...]                                        # (TB, S, H)
    w = w_ref[...]                                        # (1, H)
    b = b_ref[0, 0]                                       # f32 scalar from SMEM

    # Scores: broadcast-multiply on the VPU in the input dtype; accumulate the
    # lane reduction over H in f32.  (Output dim is 1 -> keep it off the MXU.)
    s = jnp.sum(x * w[None, :, :], axis=-1, keepdims=True,
                dtype=jnp.float32) + b                    # (TB, S, 1) f32

    # tanh bounds the logits to [-1, 1] => exp cannot overflow, so the usual
    # softmax max-subtraction is safe to skip (ONLY because of the tanh).
    e = jnp.exp(jnp.tanh(s))                              # (TB, S, 1) f32
    denom = jnp.sum(e, axis=1)                            # (TB, 1)    f32

    # Attention-weighted sum over S: multiply in the input dtype, accumulate
    # the sublane reduction in f32 (VPU/XLU only, no MXU).
    p = e.astype(x.dtype)                                 # (TB, S, 1)
    weighted = jnp.sum(p * x, axis=1, dtype=jnp.float32)  # (TB, H)    f32

    d = weighted / denom                                  # exact divide
    o_ref[...] = d.reshape(o_ref.shape).astype(o_ref.dtype)


def attention_forward(hidden_states, W_1, b_1):
    """hidden_states: [B, S, H], W_1: [H, 1], b_1: [1] -> [B, 1, H]."""
    B, S, H = hidden_states.shape
    dtype = hidden_states.dtype
    itemsize = jnp.dtype(dtype).itemsize

    # --- block sizing ---------------------------------------------------------
    vmem_cap = _vmem_capacity_bytes()
    bytes_per_batch_elem = S * H * itemsize
    # One input block <= cap/8 (f32) or cap/12 (bf16/int8, whose f32-widened
    # reduction temporaries are 2-4x the block): double buffer plus in-kernel
    # broadcast products / f32 accumulators then stay comfortably under cap.
    block_budget = vmem_cap // 8 if itemsize >= 4 else vmem_cap // 12
    tb_cap = max(1, block_budget // max(1, bytes_per_batch_elem))
    # Keep >= ~8 grid steps when B allows (>= 4 per v7x TensorCore) so the DMA
    # of block i+1 overlaps compute on block i; per-step overhead is ~0.35 us.
    target_steps = 8
    if B >= target_steps:
        tb_cap = min(tb_cap, max(1, B // target_steps))
    tb, out_2d = _choose_tb(B, tb_cap)
    # TODO(synk): if a single (1, S, H) slab exceeds the VMEM budget (very long
    # sequences), add an S grid axis ("arbitrary", last) with a flash-style
    # online softmax and running accumulators in VMEM scratch.
    # TODO(synk): for bf16/int8 inputs with S not a multiple of the dtype's
    # sublane packing (16/32), flatten x to (B*S, H) for denser VMEM packing.

    # --- operand prep (no padding, no copies of hidden_states) -----------------
    w_row = jnp.reshape(W_1, (1, H)).astype(dtype)
    b_mat = jnp.reshape(b_1, (1, 1)).astype(jnp.float32)

    if out_2d:
        out_shape = jax.ShapeDtypeStruct((B, H), dtype)
        out_spec = pl.BlockSpec((tb, H), lambda i: (i, 0))
    else:
        # Fallback (tb not 8-aligned and != B): size-1 middle dim => masked
        # stores, but output traffic is only 1/S of the input traffic.
        out_shape = jax.ShapeDtypeStruct((B, 1, H), dtype)
        out_spec = pl.BlockSpec((tb, 1, H), lambda i: (i, 0, 0))

    out = pl.pallas_call(
        _attention_kernel,
        out_shape=out_shape,
        grid_spec=pltpu.PrefetchScalarGridSpec(
            num_scalar_prefetch=0,
            grid=(B // tb,),
            in_specs=[
                # Trailing block dims are the full (S, H): exempt from (8, 128).
                pl.BlockSpec((tb, S, H), lambda i: (i, 0, 0)),      # x slab
                pl.BlockSpec((1, H), lambda i: (0, 0)),             # W row
                pl.BlockSpec(memory_space=pltpu.MemorySpace.SMEM),  # bias
            ],
            out_specs=out_spec,
        ),
        compiler_params=pltpu.CompilerParams(
            dimension_semantics=("parallel",),
            vmem_limit_bytes=int(vmem_cap),
        ),
    )(hidden_states, w_row, b_mat)

    return out.reshape(B, 1, H)


def attention_reference(hidden_states, W_1, b_1):
    B, S, H = hidden_states.shape
    hidden = hidden_states.reshape(-1, H)
    features = hidden @ W_1 + b_1                 # (B*S, 1)
    proj = jnp.tanh(features)
    u = proj.reshape(B, 1, S)
    alpha = jax.nn.softmax(u, axis=-1)
    return jnp.matmul(alpha, hidden_states)       # (B, 1, H)


if __name__ == "__main__":
    key = jax.random.PRNGKey(0)
    k_x, k_w, k_b = jax.random.split(key, 3)

    B, S, H = 2, 8, 32  # batch, seq, hidden
    hidden_states = jax.random.normal(k_x, (B, S, H), dtype=jnp.float32)
    W_1 = jax.random.normal(k_w, (H, 1), dtype=jnp.float32)
    b_1 = jax.random.normal(k_b, (1,), dtype=jnp.float32)

    out = attention_forward(hidden_states, W_1, b_1)
    out = jax.block_until_ready(out)

    ref = attention_reference(hidden_states, W_1, b_1)
    assert out.shape == (B, 1, H), out.shape
    max_err = float(jnp.max(jnp.abs(out - ref)))
    assert jnp.allclose(out, ref, atol=1e-5, rtol=1e-5), max_err
    print("KERNEL_OK")
</pallas_src>

<mosaic_0001>
module attributes {stable_mosaic.version = 11 : i64} {
  func.func @_attention_kernel(%arg0: i32, %arg1: memref<2x8x32xf32, #tpu.memory_space<vmem>>, %arg2: memref<1x32xf32, #tpu.memory_space<vmem>>, %arg3: memref<1x1xf32, #tpu.memory_space<smem>>, %arg4: memref<2x32xf32, #tpu.memory_space<vmem>>) attributes {dimension_semantics = [#tpu.dimension_semantics<parallel>], iteration_bounds = array<i64: 1>, scalar_prefetch = 0 : i64, scratch_operands = 0 : i64, tpu.core_type = #tpu.core_type<tc>, window_params = [{transform_indices = @transform_0, window_bounds = array<i64: 2, 8, 32>}, {pipeline_mode = #tpu.pipeline_mode<synchronous>, transform_indices = @transform_1, window_bounds = array<i64: 1, 32>}, {transform_indices = @transform_2, window_bounds = array<i64: 1, 1>}, {transform_indices = @transform_3, window_bounds = array<i64: 2, 32>}]} {
    %c0 = arith.constant 0 : index
    %c0_0 = arith.constant 0 : index
    %c0_1 = arith.constant 0 : index
    %0 = vector.load %arg1[%c0, %c0_0, %c0_1] : memref<2x8x32xf32, #tpu.memory_space<vmem>>, vector<2x8x32xf32>
    %c0_2 = arith.constant 0 : index
    %c0_3 = arith.constant 0 : index
    %1 = vector.load %arg2[%c0_2, %c0_3] : memref<1x32xf32, #tpu.memory_space<vmem>>, vector<1x32xf32>
    %c0_4 = arith.constant 0 : index
    %c0_5 = arith.constant 0 : index
    %2 = memref.load %arg3[%c0_4, %c0_5] : memref<1x1xf32, #tpu.memory_space<smem>>
    %3 = vector.shape_cast %1 : vector<1x32xf32> to vector<1x1x32xf32>
    %4 = vector.broadcast %3 : vector<1x1x32xf32> to vector<2x8x32xf32>
    %5 = arith.mulf %0, %4 : vector<2x8x32xf32>
    %cst = arith.constant dense<0.000000e+00> : vector<2x8xf32>
    %6 = vector.multi_reduction <add>, %5, %cst [2] : vector<2x8x32xf32> to vector<2x8xf32>
    %7 = vector.shape_cast %6 : vector<2x8xf32> to vector<2x8x1xf32>
    %8 = vector.broadcast %2 : f32 to vector<2x8x1xf32>
    %9 = arith.addf %7, %8 : vector<2x8x1xf32>
    %10 = math.tanh %9 : vector<2x8x1xf32>
    %11 = math.exp %10 : vector<2x8x1xf32>
    %cst_6 = arith.constant dense<0.000000e+00> : vector<2x1xf32>
    %12 = vector.multi_reduction <add>, %11, %cst_6 [1] : vector<2x8x1xf32> to vector<2x1xf32>
    %13 = vector.broadcast %11 : vector<2x8x1xf32> to vector<2x8x32xf32>
    %14 = arith.mulf %13, %0 : vector<2x8x32xf32>
    %cst_7 = arith.constant dense<0.000000e+00> : vector<2x32xf32>
    %15 = vector.multi_reduction <add>, %14, %cst_7 [1] : vector<2x8x32xf32> to vector<2x32xf32>
    %16 = vector.broadcast %12 : vector<2x1xf32> to vector<2x32xf32>
    %17 = arith.divf %15, %16 : vector<2x32xf32>
    %c0_8 = arith.constant 0 : index
    %c0_9 = arith.constant 0 : index
    %18 = vector.load %arg4[%c0_8, %c0_9] : memref<2x32xf32, #tpu.memory_space<vmem>>, vector<2x32xf32>
    tpu.vector_store %arg4[%c0_8, %c0_9], %17 {strides = array<i32>} : memref<2x32xf32, #tpu.memory_space<vmem>>, vector<2x32xf32>,
    return
  }
  func.func @transform_0(%arg0: i32) -> (i32, i32, i32) {
    %c0_i32 = arith.constant 0 : i32
    %c0_i32_0 = arith.constant 0 : i32
    %c0_i32_1 = arith.constant 0 : i32
    return %arg0, %c0_i32, %c0_i32_0 : i32, i32, i32
  }
  func.func @transform_1(%arg0: i32) -> (i32, i32) {
    %c0_i32 = arith.constant 0 : i32
    %c0_i32_0 = arith.constant 0 : i32
    %c0_i32_1 = arith.constant 0 : i32
    return %c0_i32, %c0_i32_0 : i32, i32
  }
  func.func @transform_2(%arg0: i32) -> (i32, i32) {
    %c0_i32 = arith.constant 0 : i32
    %c0_i32_0 = arith.constant 0 : i32
    %c0_i32_1 = arith.constant 0 : i32
    return %c0_i32, %c0_i32_0 : i32, i32
  }
  func.func @transform_3(%arg0: i32) -> (i32, i32) {
    %c0_i32 = arith.constant 0 : i32
    %c0_i32_0 = arith.constant 0 : i32
    return %arg0, %c0_i32 : i32, i32
  }
}

</mosaic_0001>

<llo_original>
// kernel: tpu_custom_call.1
$region0: #{tpu_custom_call.1}
  #allocation0 [shape = 'u32[]', space=smem, size = 0x4, offset = 0x4, fixed_abs, tag = 'smem constant byte address 0x4 - core index']
  #allocation1 [shape = 'u32[144,128]{1,0:T(1,128)}', space=vmem, size = 0x12000, scoped, tag = 'internal scratch']
  #allocation2 [shape = 'f32[1,1]{1,0:T(1,128)S(6)}', space=smem, size = 0x200, scoped, tag = 'scoped memory for tpu_custom_call.1']
  %s0 = inlined_call_operand.hbm [shape: f32[2,8,32], index: 0, kind: input, shape index: {}]
  %s1 = inlined_call_operand.vmem [shape: f32[1,32], index: 1, kind: input, shape index: {}]
  %s2 = inlined_call_operand.<no memory space> [shape: f32[1,1], index: 2, kind: input, shape index: {}]
  %s3 = inlined_call_operand.hbm [shape: f32[2,32], index: 3, kind: output, shape index: {}]
  %s4 = sld [smem:[#allocation0]]
  $region26: #{tpu_custom_call.1} parent=0
    _
  %s6 = ssub.s32 1, %s4
  %s7 = scalar_select 0, %s6, %s4
  %8 = sst [smem:[#allocation2]] %s2
  $region1: #{tpu_custom_call.1} parent=0
    #allocation3 [shape = 'u8[8192]{0}', space=vmem, size = 0x2000, scoped, tag = 'input window, operand 0, single buffered']
    #allocation4 [shape = 's32[1]{0}', space=sflag, size = 0x4, scoped, tag = 'scoped memory for tpu_custom_call.1']
    #allocation5 [shape = 's32[1]{0}', space=sflag, size = 0x4, scoped, tag = 'scoped memory for tpu_custom_call.1']
    #allocation6 [shape = 'u8[1024]{0}', space=vmem, size = 0x400, scoped, tag = 'output window, operand 0, single buffered']
    %9 = vsyncpa [#allocation4], 0
    %10 = vsyncpa [#allocation5], 0
    // Predicated region
    $region2: #{tpu_custom_call.1} parent=1 // pred_check
      _
    $region3: #{tpu_custom_call.1} parent=1 // pred_check_branch
      %12 = sbr.rel (0) target = $region5
    $region4: #{tpu_custom_call.1} parent=1 // pred_region
      %s14 = ssub.s32 256, 256
      %15 = vsyncadd [#allocation4], %s14
      %s16 = sshll.u32 [#allocation3], 4
      %s17 = int_to_ptr.vmem [resolvable:$true] %s16
      %22 = dma.hbm_to_vmem [thread:$0]  %s0, 256, %s17, [#allocation4], 128, 128, 8
    $region5: #{tpu_custom_call.1} parent=1 // pred_fallthru
      _
    // Predicated region
    $region6: #{tpu_custom_call.1} parent=1 // pred_check
      _
    $region7: #{tpu_custom_call.1} parent=1 // pred_check_branch
      %24 = sbr.rel (0) target = $region9
    $region8: #{tpu_custom_call.1} parent=1 // pred_region
      _
    $region9: #{tpu_custom_call.1} parent=1 // pred_fallthru
      _
    // Predicated region
    $region10: #{tpu_custom_call.1} parent=1 // pred_check
      _
    $region11: #{tpu_custom_call.1} parent=1 // pred_check_branch
      %26 = sbr.rel (0) target = $region13
    $region12: #{tpu_custom_call.1} parent=1 // pred_region
      _
    $region13: #{tpu_custom_call.1} parent=1 // pred_fallthru
      _
    // Predicated region
    $region14: #{tpu_custom_call.1} parent=1 // pred_check
      _
    $region15: #{tpu_custom_call.1} parent=1 // pred_check_branch
      %28 = sbr.rel (0) target = $region17
    $region16: #{tpu_custom_call.1} parent=1 // pred_region
      %29 = dma.done [#allocation4], 256
    $region17: #{tpu_custom_call.1} parent=1 // pred_fallthru
      _
    %v30 = vld [vmem:[#allocation3] sm:$0xff]
    %v31 = vld [vmem:[#allocation3 + $0x8] sm:$0xff]
    %v32 = vld [vmem:[%s1] sm:$0x1]
    %s33 = sld [smem:[#allocation2]]
    %v35 = vlaneseq
    %v36 = vshrl.u32 %v35, 7
    %v37 = vsub.s32 0, %v36
    %v38 = vrot.slane %v32, %v37
    %v40 = vmul.f32 %v30, %v38
    %v41 = vmul.f32 %v31, %v38
    %vm42 = vcmask 261120
    %v43 = vsel %vm42, %v40, 0.0
    %44 = vadd.xlane.f32.xlu0 %v43
    %v45 = vpop.xlane.xlu0 %44
    %v46 = vsel %vm42, %v41, 0.0
    %47 = vadd.xlane.f32.xlu0 %v46
    %v48 = vpop.xlane.xlu0 %47
    %v49 = vstv %s33
    %v50 = vadd.f32 %v45, %v49
    %v51 = vadd.f32 %v48, %v49
    %v52 = vtanh.pop %v50
    %v53 = vtanh.pop %v51
    %v54 = vmul.f32 %v52, 1.442695
    %v55 = vpow.pop %v54
    %v56 = vmul.f32 %v53, 1.442695
    %v57 = vpow.pop %v56
    %v58 = vrot.slane %v55, 4
    %v59 = vadd.f32 %v55, %v58
    %v60 = vrot.slane %v59, 2
    %v61 = vadd.f32 %v59, %v60
    %v62 = vrot.slane %v61, 1
    %v63 = vadd.f32 %v61, %v62
    %v64 = vrot.slane %v57, 4
    %v65 = vadd.f32 %v57, %v64
    %v66 = vrot.slane %v65, 2
    %v67 = vadd.f32 %v65, %v66
    %v68 = vrot.slane %v67, 1
    %v69 = vadd.f32 %v67, %v68
    %v70 = vmul.f32 %v55, %v30
    %v71 = vmul.f32 %v57, %v31
    %v72 = vsel %vm42, %v70, 0.0
    %v73 = vrot.slane %v72, 4
    %v74 = vadd.f32 %v72, %v73
    %v75 = vrot.slane %v74, 2
    %v76 = vadd.f32 %v74, %v75
    %v77 = vrot.slane %v76, 1
    %v78 = vadd.f32 %v76, %v77
    %v79 = vsel %vm42, %v71, 0.0
    %v80 = vrot.slane %v79, 4
    %v81 = vadd.f32 %v79, %v80
    %v82 = vrot.slane %v81, 2
    %v83 = vadd.f32 %v81, %v82
    %v84 = vrot.slane %v83, 1
    %v85 = vadd.f32 %v83, %v84
    %v86 = vrcp.pop %v63
    %v87 = vmul.f32 %v78, %v86
    %v88 = vrcp.pop %v69
    %v89 = vmul.f32 %v85, %v88
    %vm92 = vcmask 1041409
    %v93 = vsel %vm92, %v89, %v87
    %vm95 = vcmask 254976
    %96 = vst.msk [vmem:[#allocation6] sm:$0x3] %vm95, %v93
    // Predicated region
    $region18: #{tpu_custom_call.1} parent=1 // pred_check
      _
    $region19: #{tpu_custom_call.1} parent=1 // pred_check_branch
      %98 = sbr.rel (0) target = $region21
    $region20: #{tpu_custom_call.1} parent=1 // pred_region
      %s100 = ssub.s32 32, 32
      %101 = vsyncadd [#allocation5], %s100
      %s103 = sshll.u32 [#allocation6], 4
      %s104 = int_to_ptr.vmem [resolvable:$true] %s103
      %106 = dma.vmem_to_hbm [thread:$0]  %s104, 32, %s3, [#allocation5]
    $region21: #{tpu_custom_call.1} parent=1 // pred_fallthru
      _
    // Predicated region
    $region22: #{tpu_custom_call.1} parent=1 // pred_check
      _
    $region23: #{tpu_custom_call.1} parent=1 // pred_check_branch
      %108 = sbr.rel (0) target = $region25
    $region24: #{tpu_custom_call.1} parent=1 // pred_region
      %109 = dma.done [#allocation5], 32
    $region25: #{tpu_custom_call.1} parent=1 // pred_fallthru
      _
    %110 = vsyncpa [#allocation4], 1
    %111 = vsyncpa [#allocation5], 1

</llo_original>
